<compile_context>
chip_gen: v7x
topology: tpu7x:2x2x1
jax: 0.10.0
libtpu: 0.0.40
codegen_flags: <defaults>
</compile_context>

<pallas_src>
import jax
import jax.numpy as jnp
from jax.experimental import pallas as pl
from jax.experimental.pallas import tpu as pltpu

INPUT_DIM = 2
HIDDEN_DIM = 64
OUTPUT_DIM = 1
LANES = 128  # lane width of a vreg; batch tile must be a multiple of this


def _round_up(x, m):
    return (x + m - 1) // m * m


def mlnet_kernel(x_ref, w1t_ref, b1_ref, w2_ref, b2_ref, o_ref):
    x = x_ref[...]        # (INPUT_DIM, bm)
    w1t = w1t_ref[...]    # (HIDDEN_DIM, INPUT_DIM)

    # Layer 1 on the VPU: h[j, n] = sum_k W1[k, j] * x[k, n] + b1[j]
    h = b1_ref[...]                                        # (HIDDEN_DIM, 1)
    for k in range(INPUT_DIM):                             # static, INPUT_DIM == 2
        h = h + w1t[:, k:k + 1] * x[k:k + 1, :]            # (64,1)*(1,bm) -> (64,bm)
    h = jnp.maximum(h, 0.0)                                # ReLU

    # Layer 2: elementwise multiply (VPU) + hidden-axis sublane reduce (XLU)
    o = jnp.sum(w2_ref[...] * h, axis=0, keepdims=True)    # (1, bm)
    o_ref[...] = (o + b2_ref[0, 0]).astype(o_ref.dtype)    # lane-dense store


def mlnet_forward(x, w1, b1, w2, b2, *, bm=None):
    """x: (B, INPUT_DIM).  w1: (INPUT_DIM, HIDDEN_DIM), b1: (HIDDEN_DIM,) or (1, HIDDEN_DIM),
    w2: (HIDDEN_DIM, OUTPUT_DIM), b2: scalar-like.  Returns (B, OUTPUT_DIM)."""
    B, F = x.shape
    assert F == INPUT_DIM
    assert w1.shape == (INPUT_DIM, HIDDEN_DIM)
    assert w2.shape == (HIDDEN_DIM, OUTPUT_DIM)

    if bm is None:
        # Large batch tile (up to 1024) for HBM-roofline DMA; never exceeds padded B.
        bm = min(1024, _round_up(B, LANES))
    # Lane-dense layout requires whole vregs along the batch (lane) axis.
    assert bm % LANES == 0, "bm must be a multiple of 128 (lane width)"
    B_pad = _round_up(B, bm)
    grid = (B_pad // bm,)

    dt = x.dtype
    # Batch-on-lanes: transpose x and zero-pad the batch to B_pad.
    xt = jnp.zeros((INPUT_DIM, B_pad), dt).at[:, :B].set(x.T)
    w1t = jnp.asarray(w1, dt).T                                # (HIDDEN_DIM, INPUT_DIM)
    b1c = jnp.asarray(b1, dt).reshape(HIDDEN_DIM, 1)           # column: broadcast over lanes
    w2c = jnp.asarray(w2, dt).reshape(HIDDEN_DIM, OUTPUT_DIM)  # column
    b2s = jnp.asarray(b2, dt).reshape(1, 1)                    # scalar -> SMEM

    out_t = pl.pallas_call(
        mlnet_kernel,
        out_shape=jax.ShapeDtypeStruct((OUTPUT_DIM, B_pad), dt),
        grid_spec=pltpu.PrefetchScalarGridSpec(
            num_scalar_prefetch=0,
            grid=grid,
            in_specs=[
                pl.BlockSpec((INPUT_DIM, bm), lambda i: (0, i)),           # x tile (lane-dense)
                pl.BlockSpec((HIDDEN_DIM, INPUT_DIM), lambda i: (0, 0)),   # W1^T (resident)
                pl.BlockSpec((HIDDEN_DIM, 1), lambda i: (0, 0)),           # b1   (resident)
                pl.BlockSpec((HIDDEN_DIM, OUTPUT_DIM), lambda i: (0, 0)),  # W2   (resident)
                pl.BlockSpec(memory_space=pltpu.MemorySpace.SMEM),         # b2 scalar in SMEM
            ],
            out_specs=pl.BlockSpec((OUTPUT_DIM, bm), lambda i: (0, i)),    # lane-dense output
        ),
        compiler_params=pltpu.CompilerParams(
            dimension_semantics=("parallel",),      # megacore sharding on v7x
            vmem_limit_bytes=32 * 1024 * 1024,      # explicit; safe on v5e/v6e/v7x
        ),
    )(xt, w1t, b1c, w2c, b2s)

    # Back to the PyTorch layout: drop padding, (B, OUTPUT_DIM).
    return out_t[:, :B].T


def init_params(key):
    """Deterministic init mimicking torch.nn.Linear default (U[-1/sqrt(fan_in), 1/sqrt(fan_in)])."""
    k1, k2, k3, k4 = jax.random.split(key, 4)
    bound1 = 1.0 / jnp.sqrt(INPUT_DIM)
    bound2 = 1.0 / jnp.sqrt(HIDDEN_DIM)
    w1 = jax.random.uniform(k1, (INPUT_DIM, HIDDEN_DIM), jnp.float32, -bound1, bound1)
    b1 = jax.random.uniform(k2, (1, HIDDEN_DIM), jnp.float32, -bound1, bound1)
    w2 = jax.random.uniform(k3, (HIDDEN_DIM, OUTPUT_DIM), jnp.float32, -bound2, bound2)
    b2 = jax.random.uniform(k4, (1, OUTPUT_DIM), jnp.float32, -bound2, bound2)
    return w1, b1, w2, b2


if __name__ == "__main__":
    key = jax.random.PRNGKey(0)
    kx, kp = jax.random.split(key)

    # Non-multiple-of-128 batch exercises the padding path; bm=128 gives a
    # 3-step parallel grid (pipelining + both v7x TensorCores).
    B = 300
    x = jax.random.normal(kx, (B, INPUT_DIM), jnp.float32)
    w1, b1, w2, b2 = init_params(kp)

    out = mlnet_forward(x, w1, b1, w2, b2, bm=128)
    out = jax.block_until_ready(out)

    # Pure-JAX reference for correctness.
    ref = jnp.maximum(x @ w1 + b1, 0.0) @ w2 + b2
    assert out.shape == (B, OUTPUT_DIM)
    assert jnp.allclose(out, ref, atol=1e-5, rtol=1e-5)

    print("KERNEL_OK")
</pallas_src>

<mosaic_0001>
module attributes {stable_mosaic.version = 11 : i64} {
  func.func @mlnet_kernel(%arg0: i32, %arg1: memref<2x128xf32, #tpu.memory_space<vmem>>, %arg2: memref<64x2xf32, #tpu.memory_space<vmem>>, %arg3: memref<64x1xf32, #tpu.memory_space<vmem>>, %arg4: memref<64x1xf32, #tpu.memory_space<vmem>>, %arg5: memref<1x1xf32, #tpu.memory_space<smem>>, %arg6: memref<1x128xf32, #tpu.memory_space<vmem>>) attributes {dimension_semantics = [#tpu.dimension_semantics<parallel>], iteration_bounds = array<i64: 3>, scalar_prefetch = 0 : i64, scratch_operands = 0 : i64, tpu.core_type = #tpu.core_type<tc>, window_params = [{transform_indices = @transform_0, window_bounds = array<i64: 2, 128>}, {pipeline_mode = #tpu.pipeline_mode<synchronous>, transform_indices = @transform_1, window_bounds = array<i64: 64, 2>}, {pipeline_mode = #tpu.pipeline_mode<synchronous>, transform_indices = @transform_2, window_bounds = array<i64: 64, 1>}, {pipeline_mode = #tpu.pipeline_mode<synchronous>, transform_indices = @transform_3, window_bounds = array<i64: 64, 1>}, {transform_indices = @transform_4, window_bounds = array<i64: 1, 1>}, {transform_indices = @transform_5, window_bounds = array<i64: 1, 128>}]} {
    %c0 = arith.constant 0 : index
    %c0_0 = arith.constant 0 : index
    %0 = vector.load %arg1[%c0, %c0_0] : memref<2x128xf32, #tpu.memory_space<vmem>>, vector<2x128xf32>
    %c0_1 = arith.constant 0 : index
    %c0_2 = arith.constant 0 : index
    %1 = vector.load %arg2[%c0_1, %c0_2] : memref<64x2xf32, #tpu.memory_space<vmem>>, vector<64x2xf32>
    %c0_3 = arith.constant 0 : index
    %c0_4 = arith.constant 0 : index
    %2 = vector.load %arg3[%c0_3, %c0_4] : memref<64x1xf32, #tpu.memory_space<vmem>>, vector<64x1xf32>
    %3 = vector.extract_strided_slice %1 {offsets = [0, 0], sizes = [64, 1], strides = [1, 1]} : vector<64x2xf32> to vector<64x1xf32>
    %4 = vector.extract_strided_slice %0 {offsets = [0, 0], sizes = [1, 128], strides = [1, 1]} : vector<2x128xf32> to vector<1x128xf32>
    %5 = vector.broadcast %3 : vector<64x1xf32> to vector<64x128xf32>
    %6 = vector.broadcast %4 : vector<1x128xf32> to vector<64x128xf32>
    %7 = arith.mulf %5, %6 : vector<64x128xf32>
    %8 = vector.broadcast %2 : vector<64x1xf32> to vector<64x128xf32>
    %9 = arith.addf %8, %7 : vector<64x128xf32>
    %10 = vector.extract_strided_slice %1 {offsets = [0, 1], sizes = [64, 1], strides = [1, 1]} : vector<64x2xf32> to vector<64x1xf32>
    %11 = vector.extract_strided_slice %0 {offsets = [1, 0], sizes = [1, 128], strides = [1, 1]} : vector<2x128xf32> to vector<1x128xf32>
    %12 = vector.broadcast %10 : vector<64x1xf32> to vector<64x128xf32>
    %13 = vector.broadcast %11 : vector<1x128xf32> to vector<64x128xf32>
    %14 = arith.mulf %12, %13 : vector<64x128xf32>
    %15 = arith.addf %9, %14 : vector<64x128xf32>
    %cst = arith.constant 0.000000e+00 : f32
    %16 = vector.broadcast %cst : f32 to vector<64x128xf32>
    %17 = arith.maximumf %15, %16 : vector<64x128xf32>
    %c0_5 = arith.constant 0 : index
    %c0_6 = arith.constant 0 : index
    %18 = vector.load %arg4[%c0_5, %c0_6] : memref<64x1xf32, #tpu.memory_space<vmem>>, vector<64x1xf32>
    %19 = vector.broadcast %18 : vector<64x1xf32> to vector<64x128xf32>
    %20 = arith.mulf %19, %17 : vector<64x128xf32>
    %cst_7 = arith.constant dense<0.000000e+00> : vector<128xf32>
    %21 = vector.multi_reduction <add>, %20, %cst_7 [0] : vector<64x128xf32> to vector<128xf32>
    %22 = vector.shape_cast %21 : vector<128xf32> to vector<1x128xf32>
    %c0_8 = arith.constant 0 : index
    %c0_9 = arith.constant 0 : index
    %23 = memref.load %arg5[%c0_8, %c0_9] : memref<1x1xf32, #tpu.memory_space<smem>>
    %24 = vector.broadcast %23 : f32 to vector<1x128xf32>
    %25 = arith.addf %22, %24 : vector<1x128xf32>
    %c0_10 = arith.constant 0 : index
    %c0_11 = arith.constant 0 : index
    %26 = vector.load %arg6[%c0_10, %c0_11] : memref<1x128xf32, #tpu.memory_space<vmem>>, vector<1x128xf32>
    tpu.vector_store %arg6[%c0_10, %c0_11], %25 {strides = array<i32>} : memref<1x128xf32, #tpu.memory_space<vmem>>, vector<1x128xf32>,
    return
  }
  func.func @transform_0(%arg0: i32) -> (i32, i32) {
    %c0_i32 = arith.constant 0 : i32
    %c0_i32_0 = arith.constant 0 : i32
    return %c0_i32, %arg0 : i32, i32
  }
  func.func @transform_1(%arg0: i32) -> (i32, i32) {
    %c0_i32 = arith.constant 0 : i32
    %c0_i32_0 = arith.constant 0 : i32
    %c0_i32_1 = arith.constant 0 : i32
    return %c0_i32, %c0_i32_0 : i32, i32
  }
  func.func @transform_2(%arg0: i32) -> (i32, i32) {
    %c0_i32 = arith.constant 0 : i32
    %c0_i32_0 = arith.constant 0 : i32
    %c0_i32_1 = arith.constant 0 : i32
    return %c0_i32, %c0_i32_0 : i32, i32
  }
  func.func @transform_3(%arg0: i32) -> (i32, i32) {
    %c0_i32 = arith.constant 0 : i32
    %c0_i32_0 = arith.constant 0 : i32
    %c0_i32_1 = arith.constant 0 : i32
    return %c0_i32, %c0_i32_0 : i32, i32
  }
  func.func @transform_4(%arg0: i32) -> (i32, i32) {
    %c0_i32 = arith.constant 0 : i32
    %c0_i32_0 = arith.constant 0 : i32
    %c0_i32_1 = arith.constant 0 : i32
    return %c0_i32, %c0_i32_0 : i32, i32
  }
  func.func @transform_5(%arg0: i32) -> (i32, i32) {
    %c0_i32 = arith.constant 0 : i32
    %c0_i32_0 = arith.constant 0 : i32
    return %c0_i32, %arg0 : i32, i32
  }
}

</mosaic_0001>

<llo_original>
// kernel: tpu_custom_call.1
$region0: #{tpu_custom_call.1}
  #allocation0 [shape = 'u32[]', space=smem, size = 0x4, offset = 0x4, fixed_abs, tag = 'smem constant byte address 0x4 - core index']
  #allocation1 [shape = 'u32[144,128]{1,0:T(1,128)}', space=vmem, size = 0x12000, scoped, tag = 'internal scratch']
  #allocation2 [shape = 'f32[1,1]{1,0:T(1,128)S(6)}', space=smem, size = 0x200, scoped, tag = 'scoped memory for tpu_custom_call.1']
  %s0 = inlined_call_operand.vmem [shape: f32[2,384], index: 0, kind: input, shape index: {}]
  %s1 = inlined_call_operand.vmem [shape: f32[64,2], index: 1, kind: input, shape index: {}]
  %s2 = inlined_call_operand.vmem [shape: f32[64,1], index: 2, kind: input, shape index: {}]
  %s3 = inlined_call_operand.vmem [shape: f32[64,1], index: 3, kind: input, shape index: {}]
  %s4 = inlined_call_operand.<no memory space> [shape: f32[1,1], index: 4, kind: input, shape index: {}]
  %s5 = inlined_call_operand.hbm [shape: f32[1,384], index: 5, kind: output, shape index: {}]
  %s6 = sld [smem:[#allocation0]]
  $region53: #{tpu_custom_call.1} parent=0
    _
  %s8 = ssub.s32 1, %s6
  %s9 = scalar_select 0, %s8, %s6
  %10 = sst [smem:[#allocation2]] %s4
  $region1: #{tpu_custom_call.1} parent=0
    #allocation3 [shape = 'u8[1024]{0}', space=vmem, size = 0x400, scoped, tag = 'output window, operand 0']
    #allocation4 [shape = 's32[2]{0}', space=sflag, size = 0x8, scoped, tag = 'scoped memory for tpu_custom_call.1']
    %11 = vsyncpa [#allocation4], 0
    %s12 = scalar_lea.sflag [#allocation4], 1
    %13 = vsyncpa %s12, 0
    loop: start=0, step=1, limit=5
    $region2: #{tpu_custom_call.1} parent=1 // loop_pre_header
      _
    $region3: #{tpu_custom_call.1} parent=1 // loop_header
      %s15 = sphi 0, %s19
      %p16 = scmp.ge.s32.totalorder %s15, 5
      %s25 = sphi 0, %s27
      %s28 = sphi 0, %s25
      %s29 = sphi 0, %s28
      %s45 = sphi 0, %s29
      %s49 = sphi 0, %s49
      %s51 = sphi 0, %s49
      %s52 = sphi 0, %s51
      %s66 = sphi 0, %s52
      %s70 = sphi 0, %s70
      %s72 = sphi 0, %s70
      %s73 = sphi 0, %s72
      %s87 = sphi 0, %s73
      %s91 = sphi 0, %s91
      %s93 = sphi 0, %s91
      %s94 = sphi 0, %s93
      %s108 = sphi 0, %s94
      %s112 = sphi 0, %s112
      %s114 = sphi 0, %s112
      %s115 = sphi 0, %s114
      %s129 = sphi 0, %s115
      %s135 = sphi 0, %s137
      %s138 = sphi 0, %s135
      %s139 = sphi 0, %s138
      %s155 = sphi 0, %s139
    $region4: #{tpu_custom_call.1} parent=1 // loop_header_branch
      %18 = sbr.rel (%p16) target = $region8
    $region5: #{tpu_custom_call.1} parent=1 // loop_body
      %s20 = ssub.s32 %s15, 1
      %s21 = ssub.s32 %s15, 2
      %s22 = sadd.s32 %s15, 1
      %s23 = ssub.s32 %s15, %s22
      %p24 = scmp.eq.s32.totalorder %s23, 0
      %s26 = sadd.s32 %s25, 1
      %s27 = scalar_select %p24, %s25, %s26
      %p30 = pneg %p24
      %p31 = scmp.eq.s32.totalorder %s15, 2
      %p32 = por %p30, %p31
      %p33 = scmp.ne.s32.totalorder %s25, %s28
      %p34 = scmp.eq.s32.totalorder %s15, 0
      %p35 = por %p33, %p34
      %p36 = scmp.ne.s32.totalorder %s25, %s28
      %p37 = scmp.eq.s32.totalorder %s20, 2
      %p38 = por %p36, %p37
      %p39 = scmp.ne.s32.totalorder %s28, %s29
      %p40 = scmp.eq.s32.totalorder %s20, 0
      %p41 = por %p39, %p40
      %p42 = scmp.ne.s32.totalorder %s28, %s29
      %p43 = scmp.eq.s32.totalorder %s21, 2
      %p44 = por %p42, %p43
      %p46 = scmp.ne.s32.totalorder %s29, %s45
      %p47 = scmp.eq.s32.totalorder %s21, 0
      %p48 = por %p46, %p47
      %s50 = sadd.s32 %s49, 1
      %p53 = scmp.eq.s32.totalorder %s15, 2
      %p54 = scmp.ne.s32.totalorder %s49, %s51
      %p55 = scmp.eq.s32.totalorder %s15, 0
      %p56 = por %p54, %p55
      %p57 = scmp.ne.s32.totalorder %s49, %s51
      %p58 = scmp.eq.s32.totalorder %s20, 2
      %p59 = por %p57, %p58
      %p60 = scmp.ne.s32.totalorder %s51, %s52
      %p61 = scmp.eq.s32.totalorder %s20, 0
      %p62 = por %p60, %p61
      %p63 = scmp.ne.s32.totalorder %s51, %s52
      %p64 = scmp.eq.s32.totalorder %s21, 2
      %p65 = por %p63, %p64
      %p67 = scmp.ne.s32.totalorder %s52, %s66
      %p68 = scmp.eq.s32.totalorder %s21, 0
      %p69 = por %p67, %p68
      %s71 = sadd.s32 %s70, 1
      %p74 = scmp.eq.s32.totalorder %s15, 2
      %p75 = scmp.ne.s32.totalorder %s70, %s72
      %p76 = scmp.eq.s32.totalorder %s15, 0
      %p77 = por %p75, %p76
      %p78 = scmp.ne.s32.totalorder %s70, %s72
      %p79 = scmp.eq.s32.totalorder %s20, 2
      %p80 = por %p78, %p79
      %p81 = scmp.ne.s32.totalorder %s72, %s73
      %p82 = scmp.eq.s32.totalorder %s20, 0
      %p83 = por %p81, %p82
      %p84 = scmp.ne.s32.totalorder %s72, %s73
      %p85 = scmp.eq.s32.totalorder %s21, 2
      %p86 = por %p84, %p85
      %p88 = scmp.ne.s32.totalorder %s73, %s87
      %p89 = scmp.eq.s32.totalorder %s21, 0
      %p90 = por %p88, %p89
      %s92 = sadd.s32 %s91, 1
      %p95 = scmp.eq.s32.totalorder %s15, 2
      %p96 = scmp.ne.s32.totalorder %s91, %s93
      %p97 = scmp.eq.s32.totalorder %s15, 0
      %p98 = por %p96, %p97
      %p99 = scmp.ne.s32.totalorder %s91, %s93
      %p100 = scmp.eq.s32.totalorder %s20, 2
      %p101 = por %p99, %p100
      %p102 = scmp.ne.s32.totalorder %s93, %s94
      %p103 = scmp.eq.s32.totalorder %s20, 0
      %p104 = por %p102, %p103
      %p105 = scmp.ne.s32.totalorder %s93, %s94
      %p106 = scmp.eq.s32.totalorder %s21, 2
      %p107 = por %p105, %p106
      %p109 = scmp.ne.s32.totalorder %s94, %s108
      %p110 = scmp.eq.s32.totalorder %s21, 0
      %p111 = por %p109, %p110
      %s113 = sadd.s32 %s112, 1
      %p116 = scmp.eq.s32.totalorder %s15, 2
      %p117 = scmp.ne.s32.totalorder %s112, %s114
      %p118 = scmp.eq.s32.totalorder %s15, 0
      %p119 = por %p117, %p118
      %p120 = scmp.ne.s32.totalorder %s112, %s114
      %p121 = scmp.eq.s32.totalorder %s20, 2
      %p122 = por %p120, %p121
      %p123 = scmp.ne.s32.totalorder %s114, %s115
      %p124 = scmp.eq.s32.totalorder %s20, 0
      %p125 = por %p123, %p124
      %p126 = scmp.ne.s32.totalorder %s114, %s115
      %p127 = scmp.eq.s32.totalorder %s21, 2
      %p128 = por %p126, %p127
      %p130 = scmp.ne.s32.totalorder %s115, %s129
      %p131 = scmp.eq.s32.totalorder %s21, 0
      %p132 = por %p130, %p131
      %s133 = ssub.s32 %s15, %s22
      %p134 = scmp.eq.s32.totalorder %s133, 0
      %s136 = sadd.s32 %s135, 1
      %s137 = scalar_select %p134, %s135, %s136
      %p140 = pneg %p134
      %p141 = scmp.eq.s32.totalorder %s15, 2
      %p142 = por %p140, %p141
      %p143 = scmp.ne.s32.totalorder %s135, %s138
      %p144 = scmp.eq.s32.totalorder %s15, 0
      %p145 = por %p143, %p144
      %p146 = scmp.ne.s32.totalorder %s135, %s138
      %p147 = scmp.eq.s32.totalorder %s20, 2
      %p148 = por %p146, %p147
      %p149 = scmp.ne.s32.totalorder %s138, %s139
      %p150 = scmp.eq.s32.totalorder %s20, 0
      %p151 = por %p149, %p150
      %p152 = scmp.ne.s32.totalorder %s138, %s139
      %p153 = scmp.eq.s32.totalorder %s21, 2
      %p154 = por %p152, %p153
      %p156 = scmp.ne.s32.totalorder %s139, %s155
      %p157 = scmp.eq.s32.totalorder %s21, 0
      %p158 = por %p156, %p157
      %p159 = scmp.le.s32.totalorder 1, %s15
      %p160 = scmp.lt.s32.totalorder %s15, 4
      %p161 = pnand %p159, %p160
      %p162 = pneg %p161
      // Predicated region
      $region9: #{tpu_custom_call.1} parent=5 // pred_check
        _
      $region10: #{tpu_custom_call.1} parent=5 // pred_check_branch
        %164 = sbr.rel (%p161) target = $region12
      $region11: #{tpu_custom_call.1} parent=5 // pred_region
        %s165 = ssub.s32 %s15, 1
        // Predicated region
        $region13: #{tpu_custom_call.1} parent=11 // pred_check
          %p166 = pneg %p62
        $region14: #{tpu_custom_call.1} parent=11 // pred_check_branch
          %168 = sbr.rel (%p166) target = $region16
        $region15: #{tpu_custom_call.1} parent=11 // pred_region
          _
        $region16: #{tpu_custom_call.1} parent=11 // pred_fallthru
          _
        // Predicated region
        $region17: #{tpu_custom_call.1} parent=11 // pred_check
          %p169 = pneg %p83
        $region18: #{tpu_custom_call.1} parent=11 // pred_check_branch
          %171 = sbr.rel (%p169) target = $region20
        $region19: #{tpu_custom_call.1} parent=11 // pred_region
          _
        $region20: #{tpu_custom_call.1} parent=11 // pred_fallthru
          _
        // Predicated region
        $region21: #{tpu_custom_call.1} parent=11 // pred_check
          %p172 = pneg %p104
        $region22: #{tpu_custom_call.1} parent=11 // pred_check_branch
          %174 = sbr.rel (%p172) target = $region24
        $region23: #{tpu_custom_call.1} parent=11 // pred_region
          _
        $region24: #{tpu_custom_call.1} parent=11 // pred_fallthru
          _
        // Predicated region
        $region25: #{tpu_custom_call.1} parent=11 // pred_check
          %p175 = pneg %p125
        $region26: #{tpu_custom_call.1} parent=11 // pred_check_branch
          %177 = sbr.rel (%p175) target = $region28
        $region27: #{tpu_custom_call.1} parent=11 // pred_region
          _
        $region28: #{tpu_custom_call.1} parent=11 // pred_fallthru
          _
      $region12: #{tpu_custom_call.1} parent=5 // pred_fallthru
        _
      %p178 = scmp.lt.s32.totalorder %s15, 3
      // Predicated region
      $region29: #{tpu_custom_call.1} parent=5 // pred_check
        %p179 = pneg %p178
      $region30: #{tpu_custom_call.1} parent=5 // pred_check_branch
        %181 = sbr.rel (%p179) target = $region32
      $region31: #{tpu_custom_call.1} parent=5 // pred_region
        // Predicated region
        $region33: #{tpu_custom_call.1} parent=31 // pred_check
          %p182 = pneg %p35
        $region34: #{tpu_custom_call.1} parent=31 // pred_check_branch
          %184 = sbr.rel (%p182) target = $region36
        $region35: #{tpu_custom_call.1} parent=31 // pred_region
          %p185 = scmp.lt.s32.totalorder %s15, 2
          %s186 = scalar_select %p185, %s15, 2
          %s187 = smul.addr %s186, 2
          %s188 = scalar_lea.vmem %s0, %s187
        $region36: #{tpu_custom_call.1} parent=31 // pred_fallthru
          _
      $region32: #{tpu_custom_call.1} parent=5 // pred_fallthru
        _
      %p189 = scmp.le.s32.totalorder 1, %s15
      %p190 = scmp.lt.s32.totalorder %s15, 4
      %p191 = pnand %p189, %p190
      %p192 = pneg %p191
      // Predicated region
      $region37: #{tpu_custom_call.1} parent=5 // pred_check
        _
      $region38: #{tpu_custom_call.1} parent=5 // pred_check_branch
        %194 = sbr.rel (%p191) target = $region40
      $region39: #{tpu_custom_call.1} parent=5 // pred_region
        %s195 = ssub.s32 %s15, 1
        %p196 = scmp.lt.s32.totalorder %s20, 2
        %s197 = scalar_select %p196, %s20, 2
        %s198 = smul.addr %s197, 2
        %s199 = scalar_lea.vmem %s0, %s198
        %p200 = pneg %p41
        %p201 = pneg %p38
        %p202 = pneg %p62
        %p203 = pneg %p59
        %p204 = pneg %p83
        %p205 = pneg %p80
        %p206 = pneg %p104
        %p207 = pneg %p101
        %p208 = pneg %p125
        %p209 = pneg %p122
        %p210 = pneg %p151
        %p211 = pneg %p148
        %s212 = sand.u32 %s138, 1
        %s213 = scalar_lea.sflag [#allocation4], %s212
        %s214 = sand.u32 %s138, 1
        %s215 = scalar_lea.vmem [#allocation3], %s214
        %p216 = scmp.lt.s32.totalorder %s20, 2
        %s217 = scalar_select %p216, %s20, 2
        %s218 = smul.addr %s217, 2
        %s219 = scalar_lea.vmem %s0, %s218
        %v220 = vld [vmem:[%s219] sm:$0x3]
        %v221 = vld [vmem:[%s1] sm:$0xff]
        %v222 = vld [vmem:[%s1 + $0x8] sm:$0xff]
        %v223 = vld [vmem:[%s1 + $0x10] sm:$0xff]
        %v224 = vld [vmem:[%s1 + $0x18] sm:$0xff]
        %v225 = vld [vmem:[%s1 + $0x20] sm:$0xff]
        %v226 = vld [vmem:[%s1 + $0x28] sm:$0xff]
        %v227 = vld [vmem:[%s1 + $0x30] sm:$0xff]
        %v228 = vld [vmem:[%s1 + $0x38] sm:$0xff]
        %v229 = vld [vmem:[%s2] sm:$0xff]
        %v230 = vld [vmem:[%s2 + $0x8] sm:$0xff]
        %v231 = vld [vmem:[%s2 + $0x10] sm:$0xff]
        %v232 = vld [vmem:[%s2 + $0x18] sm:$0xff]
        %v233 = vld [vmem:[%s2 + $0x20] sm:$0xff]
        %v234 = vld [vmem:[%s2 + $0x28] sm:$0xff]
        %v235 = vld [vmem:[%s2 + $0x30] sm:$0xff]
        %v236 = vld [vmem:[%s2 + $0x38] sm:$0xff]
        %238 = vset.pattern.permute.xlu0 0
        %239 = vperm.xlu0 %238, %v221
        %v240 = vpop.permute.xlu0 %239
        %243 = vset.pattern.permute.xlu0 0
        %244 = vperm.xlu0 %243, %v222
        %v245 = vpop.permute.xlu0 %244
        %248 = vset.pattern.permute.xlu0 0
        %249 = vperm.xlu0 %248, %v223
        %v250 = vpop.permute.xlu0 %249
        %253 = vset.pattern.permute.xlu0 0
        %254 = vperm.xlu0 %253, %v224
        %v255 = vpop.permute.xlu0 %254
        %258 = vset.pattern.permute.xlu0 0
        %259 = vperm.xlu0 %258, %v225
        %v260 = vpop.permute.xlu0 %259
        %263 = vset.pattern.permute.xlu0 0
        %264 = vperm.xlu0 %263, %v226
        %v265 = vpop.permute.xlu0 %264
        %268 = vset.pattern.permute.xlu0 0
        %269 = vperm.xlu0 %268, %v227
        %v270 = vpop.permute.xlu0 %269
        %273 = vset.pattern.permute.xlu0 0
        %274 = vperm.xlu0 %273, %v228
        %v275 = vpop.permute.xlu0 %274
        %v277 = vlaneseq
        %v278 = vshrl.u32 %v277, 7
        %v279 = vsub.s32 0, %v278
        %v280 = vrot.slane %v220, %v279
        %v281 = vmul.f32 %v240, %v280
        %v282 = vmul.f32 %v245, %v280
        %v283 = vmul.f32 %v250, %v280
        %v284 = vmul.f32 %v255, %v280
        %v285 = vmul.f32 %v260, %v280
        %v286 = vmul.f32 %v265, %v280
        %v287 = vmul.f32 %v270, %v280
        %v288 = vmul.f32 %v275, %v280
        %290 = vset.pattern.permute.xlu0 0
        %291 = vperm.xlu0 %290, %v229
        %v292 = vpop.permute.xlu0 %291
        %295 = vset.pattern.permute.xlu0 0
        %296 = vperm.xlu0 %295, %v230
        %v297 = vpop.permute.xlu0 %296
        %300 = vset.pattern.permute.xlu0 0
        %301 = vperm.xlu0 %300, %v231
        %v302 = vpop.permute.xlu0 %301
        %305 = vset.pattern.permute.xlu0 0
        %306 = vperm.xlu0 %305, %v232
        %v307 = vpop.permute.xlu0 %306
        %310 = vset.pattern.permute.xlu0 0
        %311 = vperm.xlu0 %310, %v233
        %v312 = vpop.permute.xlu0 %311
        %315 = vset.pattern.permute.xlu0 0
        %316 = vperm.xlu0 %315, %v234
        %v317 = vpop.permute.xlu0 %316
        %320 = vset.pattern.permute.xlu0 0
        %321 = vperm.xlu0 %320, %v235
        %v322 = vpop.permute.xlu0 %321
        %325 = vset.pattern.permute.xlu0 0
        %326 = vperm.xlu0 %325, %v236
        %v327 = vpop.permute.xlu0 %326
        %v329 = vadd.f32 %v292, %v281
        %v330 = vadd.f32 %v297, %v282
        %v331 = vadd.f32 %v302, %v283
        %v332 = vadd.f32 %v307, %v284
        %v333 = vadd.f32 %v312, %v285
        %v334 = vadd.f32 %v317, %v286
        %v335 = vadd.f32 %v322, %v287
        %v336 = vadd.f32 %v327, %v288
        %337 = vset.pattern.permute.xlu0 1
        %338 = vperm.xlu0 %337, %v221
        %v339 = vpop.permute.xlu0 %338
        %341 = vset.pattern.permute.xlu0 1
        %342 = vperm.xlu0 %341, %v222
        %v343 = vpop.permute.xlu0 %342
        %345 = vset.pattern.permute.xlu0 1
        %346 = vperm.xlu0 %345, %v223
        %v347 = vpop.permute.xlu0 %346
        %349 = vset.pattern.permute.xlu0 1
        %350 = vperm.xlu0 %349, %v224
        %v351 = vpop.permute.xlu0 %350
        %353 = vset.pattern.permute.xlu0 1
        %354 = vperm.xlu0 %353, %v225
        %v355 = vpop.permute.xlu0 %354
        %357 = vset.pattern.permute.xlu0 1
        %358 = vperm.xlu0 %357, %v226
        %v359 = vpop.permute.xlu0 %358
        %361 = vset.pattern.permute.xlu0 1
        %362 = vperm.xlu0 %361, %v227
        %v363 = vpop.permute.xlu0 %362
        %365 = vset.pattern.permute.xlu0 1
        %366 = vperm.xlu0 %365, %v228
        %v367 = vpop.permute.xlu0 %366
        %v369 = vlaneseq
        %v370 = vshrl.u32 %v369, 7
        %v371 = vsub.s32 1, %v370
        %v372 = vrot.slane %v220, %v371
        %v373 = vmul.f32 %v339, %v372
        %v374 = vmul.f32 %v343, %v372
        %v375 = vmul.f32 %v347, %v372
        %v376 = vmul.f32 %v351, %v372
        %v377 = vmul.f32 %v355, %v372
        %v378 = vmul.f32 %v359, %v372
        %v379 = vmul.f32 %v363, %v372
        %v380 = vmul.f32 %v367, %v372
        %v381 = vadd.f32 %v329, %v373
        %v382 = vadd.f32 %v330, %v374
        %v383 = vadd.f32 %v331, %v375
        %v384 = vadd.f32 %v332, %v376
        %v385 = vadd.f32 %v333, %v377
        %v386 = vadd.f32 %v334, %v378
        %v387 = vadd.f32 %v335, %v379
        %v388 = vadd.f32 %v336, %v380
        %v389 = vmax.f32 %v381, 0.0
        %v390 = vmax.f32 %v382, 0.0
        %v391 = vmax.f32 %v383, 0.0
        %v392 = vmax.f32 %v384, 0.0
        %v393 = vmax.f32 %v385, 0.0
        %v394 = vmax.f32 %v386, 0.0
        %v395 = vmax.f32 %v387, 0.0
        %v396 = vmax.f32 %v388, 0.0
        %v397 = vld [vmem:[%s3] sm:$0xff]
        %v398 = vld [vmem:[%s3 + $0x8] sm:$0xff]
        %v399 = vld [vmem:[%s3 + $0x10] sm:$0xff]
        %v400 = vld [vmem:[%s3 + $0x18] sm:$0xff]
        %v401 = vld [vmem:[%s3 + $0x20] sm:$0xff]
        %v402 = vld [vmem:[%s3 + $0x28] sm:$0xff]
        %v403 = vld [vmem:[%s3 + $0x30] sm:$0xff]
        %v404 = vld [vmem:[%s3 + $0x38] sm:$0xff]
        %406 = vset.pattern.permute.xlu0 0
        %407 = vperm.xlu0 %406, %v397
        %v408 = vpop.permute.xlu0 %407
        %411 = vset.pattern.permute.xlu0 0
        %412 = vperm.xlu0 %411, %v398
        %v413 = vpop.permute.xlu0 %412
        %416 = vset.pattern.permute.xlu0 0
        %417 = vperm.xlu0 %416, %v399
        %v418 = vpop.permute.xlu0 %417
        %421 = vset.pattern.permute.xlu0 0
        %422 = vperm.xlu0 %421, %v400
        %v423 = vpop.permute.xlu0 %422
        %426 = vset.pattern.permute.xlu0 0
        %427 = vperm.xlu0 %426, %v401
        %v428 = vpop.permute.xlu0 %427
        %431 = vset.pattern.permute.xlu0 0
        %432 = vperm.xlu0 %431, %v402
        %v433 = vpop.permute.xlu0 %432
        %436 = vset.pattern.permute.xlu0 0
        %437 = vperm.xlu0 %436, %v403
        %v438 = vpop.permute.xlu0 %437
        %441 = vset.pattern.permute.xlu0 0
        %442 = vperm.xlu0 %441, %v404
        %v443 = vpop.permute.xlu0 %442
        %v445 = vmul.f32 %v408, %v389
        %v446 = vmul.f32 %v413, %v390
        %v447 = vmul.f32 %v418, %v391
        %v448 = vmul.f32 %v423, %v392
        %v449 = vmul.f32 %v428, %v393
        %v450 = vmul.f32 %v433, %v394
        %v451 = vmul.f32 %v438, %v395
        %v452 = vmul.f32 %v443, %v396
        %v453 = vadd.f32 %v445, %v446
        %v454 = vadd.f32 %v453, %v447
        %v455 = vadd.f32 %v454, %v448
        %v456 = vadd.f32 %v455, %v449
        %v457 = vadd.f32 %v456, %v450
        %v458 = vadd.f32 %v457, %v451
        %v459 = vadd.f32 %v458, %v452
        %v460 = vrot.slane %v459, 4
        %v461 = vadd.f32 %v459, %v460
        %v462 = vrot.slane %v461, 2
        %v463 = vadd.f32 %v461, %v462
        %v464 = vrot.slane %v463, 1
        %v465 = vadd.f32 %v463, %v464
        %s466 = sld [smem:[#allocation2]]
        %v467 = vstv %s466
        %v468 = vadd.f32 %v465, %v467
        %469 = vst [vmem:[%s215] sm:$0x1] %v468
        %s470 = sand.u32 %s138, 1
        %s471 = scalar_lea.sflag [#allocation4], %s470
        %s472 = sand.u32 %s138, 1
        %s473 = scalar_lea.vmem [#allocation3], %s472
        // Predicated region
        $region41: #{tpu_custom_call.1} parent=39 // pred_check
          %p474 = pneg %p148
        $region42: #{tpu_custom_call.1} parent=39 // pred_check_branch
          %476 = sbr.rel (%p474) target = $region44
        $region43: #{tpu_custom_call.1} parent=39 // pred_region
          %s478 = ssub.s32 16, 16
          %479 = vsyncadd %s471, %s478
          %s480 = smul.addr %s20, 16
          %s481 = scalar_lea.hbm %s5, %s480
          %s483 = sshll.u32 %s473, 4
          %s484 = int_to_ptr.vmem [resolvable:$true] %s483
          %486 = dma.vmem_to_hbm [thread:$0]  %s484, 16, %s481, %s471
        $region44: #{tpu_custom_call.1} parent=39 // pred_fallthru
          _
      $region40: #{tpu_custom_call.1} parent=5 // pred_fallthru
        _
      %p487 = scmp.le.s32.totalorder 2, %s15
      // Predicated region
      $region45: #{tpu_custom_call.1} parent=5 // pred_check
        %p488 = pneg %p487
      $region46: #{tpu_custom_call.1} parent=5 // pred_check_branch
        %490 = sbr.rel (%p488) target = $region48
      $region47: #{tpu_custom_call.1} parent=5 // pred_region
        %s491 = ssub.s32 %s15, 2
        // Predicated region
        $region49: #{tpu_custom_call.1} parent=47 // pred_check
          %p492 = pneg %p154
        $region50: #{tpu_custom_call.1} parent=47 // pred_check_branch
          %494 = sbr.rel (%p492) target = $region52
        $region51: #{tpu_custom_call.1} parent=47 // pred_region
          %s495 = sand.u32 %s139, 1
          %s496 = scalar_lea.sflag [#allocation4], %s495
          %s497 = sand.u32 %s139, 1
          %s498 = scalar_lea.vmem [#allocation3], %s497
          %499 = dma.done %s496, 16
        $region52: #{tpu_custom_call.1} parent=47 // pred_fallthru
          _
      $region48: #{tpu_custom_call.1} parent=5 // pred_fallthru
        _
    $region6: #{tpu_custom_call.1} parent=1 // loop_footer
      %s19 = sadd.s32 1, %s15
    $region7: #{tpu_custom_call.1} parent=1 // loop_footer_branch
      %14 = sbr.rel target = $region3
    $region8: #{tpu_custom_call.1} parent=1 // loop_exit
      _
    %500 = vsyncpa [#allocation4], 1
    %s501 = scalar_lea.sflag [#allocation4], 1
    %502 = vsyncpa %s501, 1

</llo_original>
